<compile_context>
chip_gen: v6e
topology: v6e:2x2x1
jax: 0.10.0
libtpu: 0.0.40
codegen_flags: <defaults>
</compile_context>

<pallas_src>
import jax
import jax.numpy as jnp
from jax.experimental import pallas as pl
from jax.experimental.pallas import tpu as pltpu


# ----------------------------------------------------------------------------
# Pallas kernels
# ----------------------------------------------------------------------------
def _linear_relu_kernel(x_ref, w_ref, b_ref, o_ref):
    # relu(x @ w + b); bf16 MXU operands, f32 accumulate, f32 epilogue.
    y = jnp.dot(x_ref[...].astype(jnp.bfloat16), w_ref[...],
                preferred_element_type=jnp.float32)
    o_ref[...] = jnp.maximum(y + b_ref[...], 0.0)


def linear_relu(x, w_bf16, b):
    """y = relu(x @ w + b); x:[M,K] f32 (M % 8 == 0), w:[K,N] bf16 -> [M,N] f32."""
    M, K = x.shape
    N = w_bf16.shape[1]
    assert M % 8 == 0
    tm = M
    for cand in (1024, 512, 256):
        if M % cand == 0:
            tm = cand
            break
    return pl.pallas_call(
        _linear_relu_kernel,
        out_shape=jax.ShapeDtypeStruct((M, N), jnp.float32),
        grid=(M // tm,),
        in_specs=[
            pl.BlockSpec((tm, K), lambda i: (i, 0)),
            pl.BlockSpec((K, N), lambda i: (0, 0)),
            pl.BlockSpec((1, N), lambda i: (0, 0)),
        ],
        out_specs=pl.BlockSpec((tm, N), lambda i: (i, 0)),
        compiler_params=pltpu.CompilerParams(dimension_semantics=("parallel",)),
    )(x, w_bf16, b.reshape(1, N))


def _decoder_kernel(x_ref, bias_ref,
                    v0_ref, v1_ref, v2_ref, v3_ref,
                    w0_ref, w1_ref, w2_ref, w3_ref,
                    lvlb_ref, r0_ref, r1_ref, r2_ref,
                    headw_ref, bh_ref,
                    o_ref, feat_ref):
    """Fused decoder for one (batch, 8-output-row) tile.

    For each pyramid level: mean over T (f32 VPU adds), project C->128 on the
    MXU (bf16 in / f32 acc), ReLU, then nearest-neighbour upsample to the
    8x96 output footprint via a small 0/1 replication matmul (level 3 is
    already full resolution).  The 768x128 fused feature lives in a VMEM
    scratch; the epilogue adds the per-batch bias and x*wx, applies ReLU and
    reduces over the 128 channels for the 1-channel saliency head.
    """
    v_refs = (v0_ref, v1_ref, v2_ref, v3_ref)
    w_refs = (w0_ref, w1_ref, w2_ref, w3_ref)
    r_refs = (r0_ref, r1_ref, r2_ref, None)

    for lvl in range(4):
        vr = v_refs[lvl]
        T, th_l, w_l, c_l = vr.shape
        acc = vr[0].astype(jnp.float32)
        for t in range(1, T):
            acc = acc + vr[t].astype(jnp.float32)
        vm = (acc * (1.0 / T)).reshape(th_l * w_l, c_l)          # temporal mean
        proj = jnp.dot(vm.astype(jnp.bfloat16), w_refs[lvl][...],
                       preferred_element_type=jnp.float32)
        proj = jnp.maximum(proj + lvlb_ref[lvl:lvl + 1, :], 0.0)  # (q_l, 128)
        if r_refs[lvl] is not None:
            # nearest-neighbour upsample as a {0,1} replication matmul
            up = jnp.dot(r_refs[lvl][...], proj.astype(jnp.bfloat16),
                         preferred_element_type=jnp.float32)      # (768, 128)
        else:
            up = proj                                             # level 3: 1:1
        if lvl == 0:
            feat_ref[...] = up
        else:
            feat_ref[...] = feat_ref[...] + up

    th, wo = o_ref.shape[1], o_ref.shape[2]
    d = feat_ref.shape[1]
    feat3 = feat_ref[...].reshape(th, wo, d)                      # (8, 96, 128)
    wx = headw_ref[0:1, :]                                        # (1, 128)
    wh = headw_ref[1:2, :]                                        # (1, 128)
    h = jnp.maximum(feat3 + bias_ref[...] + x_ref[0] * wx, 0.0)   # (8, 96, 128)
    out = jnp.sum(h * wh, axis=-1) + bh_ref[0, 0]                 # (8, 96)
    o_ref[0] = out


# ----------------------------------------------------------------------------
# glue helpers (plain JAX, tiny tensors only)
# ----------------------------------------------------------------------------
def timestep_embedding(t, dim):
    half = dim // 2
    freqs = jnp.exp(-jnp.log(10000.0) * jnp.arange(half, dtype=jnp.float32) / half)
    args = t.astype(jnp.float32)[:, None] * freqs[None, :]
    return jnp.concatenate([jnp.sin(args), jnp.cos(args)], axis=-1)


# ----------------------------------------------------------------------------
# model
# ----------------------------------------------------------------------------
class VideoSaliencyModel:
    D = 128            # decoder fusion width
    OUT_H, OUT_W = 56, 96
    TH = 8             # output rows per decoder grid step (56 = 7 * 8)
    T_FEAT = 8         # temporal depth of the visual feature pyramid

    def __init__(self, channel_list, key):
        self.channel_list = channel_list
        # (channels, h, w) of the hard-coded pyramid levels from the reference.
        self.level_dims = list(zip(channel_list, (7, 14, 28, 56), (12, 24, 48, 96)))
        ks = jax.random.split(key, 16)

        def init(k, shape, scale=0.02):
            return scale * jax.random.normal(k, shape, jnp.float32)

        # audio_net (VGGish stand-in): 16x16 patch -> 128 channels
        # TODO(synk): real VGGish forward_feat is registry-built / unspecified.
        self.audio_w = init(ks[0], (256, 128)).astype(jnp.bfloat16)
        self.audio_b = jnp.zeros((128,), jnp.float32)

        # fc = Linear(128,512)+ReLU+Linear(512,768): created in __init__ but
        # (faithful to the reference forward) never used.
        self.fc_w1 = init(ks[1], (128, 512))
        self.fc_b1 = jnp.zeros((512,), jnp.float32)
        self.fc_w2 = init(ks[2], (512, 768))
        self.fc_b2 = jnp.zeros((768,), jnp.float32)

        # decoder_net stand-in parameters
        # TODO(synk): real decoder_net is registry-built / unspecified.
        self.vis_w = [init(ks[3 + i], (c, self.D)).astype(jnp.bfloat16)
                      for i, (c, _, _) in enumerate(self.level_dims)]
        self.lvl_b = jnp.zeros((4, self.D), jnp.float32)
        self.aud_w = init(ks[8], (self.D, self.D))
        self.aud_b = jnp.zeros((self.D,), jnp.float32)
        self.t_w = init(ks[9], (self.D, self.D))
        self.t_b = jnp.zeros((self.D,), jnp.float32)
        wx = init(ks[10], (1, self.D))
        head_col = init(ks[11], (self.D, 1))
        self.head_w = jnp.concatenate([wx, head_col.T], axis=0)   # (2,D): [wx; wh]
        self.head_b = jnp.zeros((1, 1), jnp.float32)

        # nearest-neighbour upsample as replication matmuls (level 3 = identity)
        self.R_mats = [self._make_R(h, w) for (_, h, w) in self.level_dims[:3]]

    def _make_R(self, h_l, w_l):
        fH = self.OUT_H // h_l
        fW = self.OUT_W // w_l
        th_l = self.TH // fH
        rows = jnp.arange(self.TH)[:, None] // fH           # coarse row in tile
        cols = jnp.arange(self.OUT_W)[None, :] // fW         # coarse col
        q = (rows * w_l + cols).reshape(-1)                   # (TH*W,)
        return (q[:, None] == jnp.arange(th_l * w_l)[None, :]).astype(jnp.bfloat16)

    # ---- audio branch -------------------------------------------------------
    def forward_vggish(self, audio):
        # audio: [b, 1, T, 96, 64]  (NC T H W)
        bs, T = audio.shape[0], audio.shape[2]
        a = audio.reshape(-1, audio.shape[1], audio.shape[3], audio.shape[4])
        bt = a.shape[0]
        # patchify 96x64 into a 6x4 grid of 16x16 patches -> Pallas linear 256->128
        patches = (a.reshape(bt, 1, 6, 16, 4, 16)
                     .transpose(0, 2, 4, 1, 3, 5)
                     .reshape(bt * 24, 256).astype(jnp.float32))
        feat = linear_relu(patches, self.audio_w, self.audio_b)   # [bt*24,128]
        feat_map = feat.reshape(bt, 6, 4, 128).transpose(0, 3, 1, 2)      # [bt,128,6,4]
        feat_map = feat_map.reshape(bs, T, 128, 6, 4).transpose(0, 2, 1, 3, 4)
        # spatiotemp_net is None in this configuration -> pass through
        return feat_map, feat_map

    # ---- fused decoder ------------------------------------------------------
    def decoder(self, x, t, vis_list, audio_feat_embed):
        B = x.shape[0]
        H, W, D, TH = self.OUT_H, self.OUT_W, self.D, self.TH
        NH = H // TH

        # tiny per-batch bias (audio + timestep embedding) in plain JAX
        aud = audio_feat_embed.mean(axis=(2, 3, 4)).astype(jnp.float32)   # [B,128]
        aud = jax.nn.relu(aud @ self.aud_w + self.aud_b)
        temb = jax.nn.relu(timestep_embedding(t, D) @ self.t_w + self.t_b)
        bias_bd = (aud + temb).astype(jnp.float32)                        # [B,128]

        x_r = x.reshape(B, H, W, 1).astype(jnp.float32)                   # NCHW -> NHWC

        in_specs = [
            pl.BlockSpec((1, TH, W, 1), lambda b, i: (b, i, 0, 0)),       # x
            pl.BlockSpec((1, D), lambda b, i: (b, 0)),                    # per-batch bias
        ]
        for (c, h, w) in self.level_dims:
            th_l = TH * h // H
            in_specs.append(
                pl.BlockSpec((self.T_FEAT, th_l, w, c), lambda b, i: (b, i, 0, 0)))
        for (c, _, _) in self.level_dims:
            in_specs.append(pl.BlockSpec((c, D), lambda b, i: (0, 0)))    # proj weights
        in_specs.append(pl.BlockSpec((4, D), lambda b, i: (0, 0)))        # level biases
        for R in self.R_mats:
            in_specs.append(pl.BlockSpec(R.shape, lambda b, i: (0, 0)))   # upsamplers
        in_specs.append(pl.BlockSpec((2, D), lambda b, i: (0, 0)))        # [wx; wh]
        in_specs.append(pl.BlockSpec((1, 1), lambda b, i: (0, 0)))        # head bias

        out = pl.pallas_call(
            _decoder_kernel,
            out_shape=jax.ShapeDtypeStruct((B, H, W), jnp.float32),
            grid=(B, NH),
            in_specs=in_specs,
            out_specs=pl.BlockSpec((1, TH, W), lambda b, i: (b, i, 0)),
            scratch_shapes=[pltpu.VMEM((TH * W, D), jnp.float32)],
            compiler_params=pltpu.CompilerParams(
                dimension_semantics=("parallel", "parallel")),
        )(x_r, bias_bd, *vis_list, *self.vis_w, self.lvl_b,
          *self.R_mats, self.head_w, self.head_b)
        return out.reshape(B, 1, H, W)                                    # NCHW

    # ---- forward ------------------------------------------------------------
    def forward(self, data, t):
        imgs = data.get('img', None)
        x = data['input']
        audio_input = data.get('audio', None)
        audio_feat, audio_feat_embed = self.forward_vggish(audio_input)

        # visual_net is None in this configuration -> reference falls back to a
        # hard-coded random feature pyramid.  Generated in bf16 and directly in
        # a channel-last [B*T, h, w, C] layout so the fused decoder reads it
        # without any relayout (values are random placeholders either way).
        # TODO(synk): visual backbone is registry-built and unspecified; the
        # pyramid could also be generated in-kernel (pltpu.stateful_normal) to
        # remove its HBM round-trip entirely.
        B = audio_feat.shape[0]
        kv = jax.random.split(jax.random.PRNGKey(42), 4)
        vis_list = [
            jax.random.normal(kv[l], (B * self.T_FEAT, h, w, c), jnp.bfloat16)
            for l, (c, h, w) in enumerate(self.level_dims)
        ]
        del imgs
        return self.decoder(x, t, vis_list, audio_feat_embed)


if __name__ == "__main__":
    key = jax.random.PRNGKey(0)
    k_x, k_a, k_t, k_p = jax.random.split(key, 4)
    B, T = 2, 4
    data = {
        'input': jax.random.normal(k_x, (B, 1, 56, 96), jnp.float32),
        'audio': jax.random.normal(k_a, (B, 1, T, 96, 64), jnp.float32),
        'img': None,
    }
    t = jax.random.randint(k_t, (B,), 0, 1000).astype(jnp.float32)

    model = VideoSaliencyModel(channel_list=[768, 384, 192, 96], key=k_p)
    out = model.forward(data, t)
    jax.block_until_ready(out)
    assert out.shape == (B, 1, 56, 96) and out.dtype == jnp.float32
    assert bool(jnp.all(jnp.isfinite(out)))
    print("KERNEL_OK")
</pallas_src>

<mosaic_0001>
module attributes {stable_mosaic.version = 11 : i64} {
  func.func @_linear_relu_kernel(%arg0: i32, %arg1: memref<192x256xf32, #tpu.memory_space<vmem>>, %arg2: memref<256x128xbf16, #tpu.memory_space<vmem>>, %arg3: memref<1x128xf32, #tpu.memory_space<vmem>>, %arg4: memref<192x128xf32, #tpu.memory_space<vmem>>) attributes {dimension_semantics = [#tpu.dimension_semantics<parallel>], iteration_bounds = array<i64: 1>, scalar_prefetch = 0 : i64, scratch_operands = 0 : i64, tpu.core_type = #tpu.core_type<tc>, window_params = [{transform_indices = @transform_0, window_bounds = array<i64: 192, 256>}, {pipeline_mode = #tpu.pipeline_mode<synchronous>, transform_indices = @transform_1, window_bounds = array<i64: 256, 128>}, {pipeline_mode = #tpu.pipeline_mode<synchronous>, transform_indices = @transform_2, window_bounds = array<i64: 1, 128>}, {transform_indices = @transform_3, window_bounds = array<i64: 192, 128>}]} {
    %c0 = arith.constant 0 : index
    %c0_0 = arith.constant 0 : index
    %0 = vector.load %arg1[%c0, %c0_0] : memref<192x256xf32, #tpu.memory_space<vmem>>, vector<192x256xf32>
    %1 = arith.truncf %0 : vector<192x256xf32> to vector<192x256xbf16>
    %c0_1 = arith.constant 0 : index
    %c0_2 = arith.constant 0 : index
    %2 = vector.load %arg2[%c0_1, %c0_2] : memref<256x128xbf16, #tpu.memory_space<vmem>>, vector<256x128xbf16>
    %cst = arith.constant dense<0.000000e+00> : vector<192x128xf32>
    %3 = tpu.matmul %1, %2, %cst {dimension_numbers = #tpu.dot_dimension_numbers<[1], [0], [0], [1], [0, 0, 1, 1], [], []>} : vector<192x256xbf16>, vector<256x128xbf16>, vector<192x128xf32> -> vector<192x128xf32>
    %c0_3 = arith.constant 0 : index
    %c0_4 = arith.constant 0 : index
    %4 = vector.load %arg3[%c0_3, %c0_4] : memref<1x128xf32, #tpu.memory_space<vmem>>, vector<1x128xf32>
    %5 = vector.broadcast %4 : vector<1x128xf32> to vector<192x128xf32>
    %6 = arith.addf %3, %5 : vector<192x128xf32>
    %cst_5 = arith.constant 0.000000e+00 : f32
    %7 = vector.broadcast %cst_5 : f32 to vector<192x128xf32>
    %8 = arith.maximumf %6, %7 : vector<192x128xf32>
    %c0_6 = arith.constant 0 : index
    %c0_7 = arith.constant 0 : index
    %9 = vector.load %arg4[%c0_6, %c0_7] : memref<192x128xf32, #tpu.memory_space<vmem>>, vector<192x128xf32>
    tpu.vector_store %arg4[%c0_6, %c0_7], %8 {strides = array<i32>} : memref<192x128xf32, #tpu.memory_space<vmem>>, vector<192x128xf32>,
    return
  }
  func.func @transform_0(%arg0: i32) -> (i32, i32) {
    %c0_i32 = arith.constant 0 : i32
    %c0_i32_0 = arith.constant 0 : i32
    return %arg0, %c0_i32 : i32, i32
  }
  func.func @transform_1(%arg0: i32) -> (i32, i32) {
    %c0_i32 = arith.constant 0 : i32
    %c0_i32_0 = arith.constant 0 : i32
    %c0_i32_1 = arith.constant 0 : i32
    return %c0_i32, %c0_i32_0 : i32, i32
  }
  func.func @transform_2(%arg0: i32) -> (i32, i32) {
    %c0_i32 = arith.constant 0 : i32
    %c0_i32_0 = arith.constant 0 : i32
    %c0_i32_1 = arith.constant 0 : i32
    return %c0_i32, %c0_i32_0 : i32, i32
  }
  func.func @transform_3(%arg0: i32) -> (i32, i32) {
    %c0_i32 = arith.constant 0 : i32
    %c0_i32_0 = arith.constant 0 : i32
    return %arg0, %c0_i32 : i32, i32
  }
}

</mosaic_0001>

<llo_original>
// kernel: tpu_custom_call.1
$region0: #{tpu_custom_call.1}
  #allocation0 [shape = 'u32[]', space=smem, size = 0x4, offset = 0x4, fixed_abs, tag = 'smem constant byte address 0x4 - core index']
  #allocation1 [shape = 'u32[144,128]{1,0:T(1,128)}', space=vmem, size = 0x12000, scoped, tag = 'internal scratch']
  %s0 = inlined_call_operand.hbm [shape: f32[192,256], index: 0, kind: input, shape index: {}]
  %s1 = inlined_call_operand.hbm [shape: bf16[256,128], index: 1, kind: input, shape index: {}]
  %s2 = inlined_call_operand.vmem [shape: f32[1,128], index: 2, kind: input, shape index: {}]
  %s3 = inlined_call_operand.hbm [shape: f32[192,128], index: 3, kind: output, shape index: {}]
  %s4 = sld [smem:[#allocation0]]
  $region30: #{tpu_custom_call.1} parent=0
    _
  %s6 = ssub.s32 1, %s4
  %s7 = scalar_select 0, %s6, %s4
  $region1: #{tpu_custom_call.1} parent=0
    #allocation2 [shape = 'u8[196608]{0}', space=vmem, size = 0x30000, scoped, tag = 'input window, operand 0, single buffered']
    #allocation3 [shape = 's32[1]{0}', space=sflag, size = 0x4, scoped, tag = 'scoped memory for tpu_custom_call.1']
    #allocation4 [shape = 's32[1]{0}', space=sflag, size = 0x4, scoped, tag = 'scoped memory for tpu_custom_call.1']
    #allocation5 [shape = 'u8[65536]{0}', space=vmem, size = 0x10000, scoped, tag = 'input window, operand 1, single buffered']
    #allocation6 [shape = 's32[1]{0}', space=sflag, size = 0x4, scoped, tag = 'scoped memory for tpu_custom_call.1']
    #allocation7 [shape = 'u8[98304]{0}', space=vmem, size = 0x18000, scoped, tag = 'output window, operand 0, single buffered']
    %8 = vsyncpa [#allocation3], 0
    %9 = vsyncpa [#allocation6], 0
    %10 = vsyncpa [#allocation4], 0
    // Predicated region
    $region2: #{tpu_custom_call.1} parent=1 // pred_check
      _
    $region3: #{tpu_custom_call.1} parent=1 // pred_check_branch
      %12 = sbr.rel (0) target = $region5
    $region4: #{tpu_custom_call.1} parent=1 // pred_region
      %s14 = ssub.s32 6144, 6144
      %15 = vsyncadd [#allocation3], %s14
      %s16 = sshll.u32 [#allocation2], 4
      %s17 = int_to_ptr.vmem [resolvable:$true] %s16
      %22 = dma.hbm_to_vmem [thread:$0]  %s0, 6144, %s17, [#allocation3], 256, 256, 16
    $region5: #{tpu_custom_call.1} parent=1 // pred_fallthru
      _
    // Predicated region
    $region6: #{tpu_custom_call.1} parent=1 // pred_check
      _
    $region7: #{tpu_custom_call.1} parent=1 // pred_check_branch
      %24 = sbr.rel (0) target = $region9
    $region8: #{tpu_custom_call.1} parent=1 // pred_region
      %s26 = ssub.s32 2048, 2048
      %27 = vsyncadd [#allocation6], %s26
      %s28 = sshll.u32 [#allocation5], 4
      %s29 = int_to_ptr.vmem [resolvable:$true] %s28
      %34 = dma.hbm_to_vmem [thread:$0]  %s1, 2048, %s29, [#allocation6], 64, 64, 4
    $region9: #{tpu_custom_call.1} parent=1 // pred_fallthru
      _
    // Predicated region
    $region10: #{tpu_custom_call.1} parent=1 // pred_check
      _
    $region11: #{tpu_custom_call.1} parent=1 // pred_check_branch
      %36 = sbr.rel (0) target = $region13
    $region12: #{tpu_custom_call.1} parent=1 // pred_region
      _
    $region13: #{tpu_custom_call.1} parent=1 // pred_fallthru
      _
    // Predicated region
    $region14: #{tpu_custom_call.1} parent=1 // pred_check
      _
    $region15: #{tpu_custom_call.1} parent=1 // pred_check_branch
      %38 = sbr.rel (0) target = $region17
    $region16: #{tpu_custom_call.1} parent=1 // pred_region
      %39 = dma.done [#allocation3], 6144
    $region17: #{tpu_custom_call.1} parent=1 // pred_fallthru
      _
    // Predicated region
    $region18: #{tpu_custom_call.1} parent=1 // pred_check
      _
    $region19: #{tpu_custom_call.1} parent=1 // pred_check_branch
      %41 = sbr.rel (0) target = $region21
    $region20: #{tpu_custom_call.1} parent=1 // pred_region
      %42 = dma.done [#allocation6], 2048
    $region21: #{tpu_custom_call.1} parent=1 // pred_fallthru
      _
    %v44 = vld [vmem:[#allocation2] sm:$0xff]
    %v45 = vld [vmem:[#allocation2 + $0x8] sm:$0xff]
    %v46 = vld [vmem:[#allocation2 + $0x10] sm:$0xff]
    %v47 = vld [vmem:[#allocation2 + $0x18] sm:$0xff]
    %v48 = vld [vmem:[#allocation2 + $0x20] sm:$0xff]
    %v49 = vld [vmem:[#allocation2 + $0x28] sm:$0xff]
    %v50 = vld [vmem:[#allocation2 + $0x30] sm:$0xff]
    %v51 = vld [vmem:[#allocation2 + $0x38] sm:$0xff]
    %v52 = vld [vmem:[#allocation2 + $0x40] sm:$0xff]
    %v53 = vld [vmem:[#allocation2 + $0x48] sm:$0xff]
    %v54 = vld [vmem:[#allocation2 + $0x50] sm:$0xff]
    %v55 = vld [vmem:[#allocation2 + $0x58] sm:$0xff]
    %v56 = vld [vmem:[#allocation2 + $0x60] sm:$0xff]
    %v57 = vld [vmem:[#allocation2 + $0x68] sm:$0xff]
    %v58 = vld [vmem:[#allocation2 + $0x70] sm:$0xff]
    %v59 = vld [vmem:[#allocation2 + $0x78] sm:$0xff]
    %v60 = vld [vmem:[#allocation2 + $0x80] sm:$0xff]
    %v61 = vld [vmem:[#allocation2 + $0x88] sm:$0xff]
    %v62 = vld [vmem:[#allocation2 + $0x90] sm:$0xff]
    %v63 = vld [vmem:[#allocation2 + $0x98] sm:$0xff]
    %v64 = vld [vmem:[#allocation2 + $0xa0] sm:$0xff]
    %v65 = vld [vmem:[#allocation2 + $0xa8] sm:$0xff]
    %v66 = vld [vmem:[#allocation2 + $0xb0] sm:$0xff]
    %v67 = vld [vmem:[#allocation2 + $0xb8] sm:$0xff]
    %v68 = vld [vmem:[#allocation2 + $0xc0] sm:$0xff]
    %v69 = vld [vmem:[#allocation2 + $0xc8] sm:$0xff]
    %v70 = vld [vmem:[#allocation2 + $0xd0] sm:$0xff]
    %v71 = vld [vmem:[#allocation2 + $0xd8] sm:$0xff]
    %v72 = vld [vmem:[#allocation2 + $0xe0] sm:$0xff]
    %v73 = vld [vmem:[#allocation2 + $0xe8] sm:$0xff]
    %v74 = vld [vmem:[#allocation2 + $0xf0] sm:$0xff]
    %v75 = vld [vmem:[#allocation2 + $0xf8] sm:$0xff]
    %v76 = vld [vmem:[#allocation2 + $0x100] sm:$0xff]
    %v77 = vld [vmem:[#allocation2 + $0x108] sm:$0xff]
    %v78 = vld [vmem:[#allocation2 + $0x110] sm:$0xff]
    %v79 = vld [vmem:[#allocation2 + $0x118] sm:$0xff]
    %v80 = vld [vmem:[#allocation2 + $0x120] sm:$0xff]
    %v81 = vld [vmem:[#allocation2 + $0x128] sm:$0xff]
    %v82 = vld [vmem:[#allocation2 + $0x130] sm:$0xff]
    %v83 = vld [vmem:[#allocation2 + $0x138] sm:$0xff]
    %v84 = vld [vmem:[#allocation2 + $0x140] sm:$0xff]
    %v85 = vld [vmem:[#allocation2 + $0x148] sm:$0xff]
    %v86 = vld [vmem:[#allocation2 + $0x150] sm:$0xff]
    %v87 = vld [vmem:[#allocation2 + $0x158] sm:$0xff]
    %v88 = vld [vmem:[#allocation2 + $0x160] sm:$0xff]
    %v89 = vld [vmem:[#allocation2 + $0x168] sm:$0xff]
    %v90 = vld [vmem:[#allocation2 + $0x170] sm:$0xff]
    %v91 = vld [vmem:[#allocation2 + $0x178] sm:$0xff]
    %v92 = vpack.c.bf16 %v46, %v44
    %v93 = vpack.c.bf16 %v47, %v45
    %v94 = vpack.c.bf16 %v50, %v48
    %v95 = vpack.c.bf16 %v51, %v49
    %v96 = vpack.c.bf16 %v54, %v52
    %v97 = vpack.c.bf16 %v55, %v53
    %v98 = vpack.c.bf16 %v58, %v56
    %v99 = vpack.c.bf16 %v59, %v57
    %v100 = vpack.c.bf16 %v62, %v60
    %v101 = vpack.c.bf16 %v63, %v61
    %v102 = vpack.c.bf16 %v66, %v64
    %v103 = vpack.c.bf16 %v67, %v65
    %v104 = vpack.c.bf16 %v70, %v68
    %v105 = vpack.c.bf16 %v71, %v69
    %v106 = vpack.c.bf16 %v74, %v72
    %v107 = vpack.c.bf16 %v75, %v73
    %v108 = vpack.c.bf16 %v78, %v76
    %v109 = vpack.c.bf16 %v79, %v77
    %v110 = vpack.c.bf16 %v82, %v80
    %v111 = vpack.c.bf16 %v83, %v81
    %v112 = vpack.c.bf16 %v86, %v84
    %v113 = vpack.c.bf16 %v87, %v85
    %v114 = vpack.c.bf16 %v90, %v88
    %v115 = vpack.c.bf16 %v91, %v89
    %v116 = vld [vmem:[#allocation5] sm:$0xf]
    %v117 = vld [vmem:[#allocation5 + $0x4] sm:$0xf]
    %v118 = vld [vmem:[#allocation5 + $0x8] sm:$0xf]
    %v119 = vld [vmem:[#allocation5 + $0xc] sm:$0xf]
    %v120 = vld [vmem:[#allocation5 + $0x10] sm:$0xf]
    %v121 = vld [vmem:[#allocation5 + $0x14] sm:$0xf]
    %v122 = vld [vmem:[#allocation5 + $0x18] sm:$0xf]
    %v123 = vld [vmem:[#allocation5 + $0x1c] sm:$0xf]
    %v124 = vld [vmem:[#allocation5 + $0x20] sm:$0xf]
    %v125 = vld [vmem:[#allocation5 + $0x24] sm:$0xf]
    %v126 = vld [vmem:[#allocation5 + $0x28] sm:$0xf]
    %v127 = vld [vmem:[#allocation5 + $0x2c] sm:$0xf]
    %v128 = vld [vmem:[#allocation5 + $0x30] sm:$0xf]
    %v129 = vld [vmem:[#allocation5 + $0x34] sm:$0xf]
    %v130 = vld [vmem:[#allocation5 + $0x38] sm:$0xf]
    %v131 = vld [vmem:[#allocation5 + $0x3c] sm:$0xf]
    %v132 = vld [vmem:[#allocation5 + $0x40] sm:$0xf]
    %v133 = vld [vmem:[#allocation5 + $0x44] sm:$0xf]
    %v134 = vld [vmem:[#allocation5 + $0x48] sm:$0xf]
    %v135 = vld [vmem:[#allocation5 + $0x4c] sm:$0xf]
    %v136 = vld [vmem:[#allocation5 + $0x50] sm:$0xf]
    %v137 = vld [vmem:[#allocation5 + $0x54] sm:$0xf]
    %v138 = vld [vmem:[#allocation5 + $0x58] sm:$0xf]
    %v139 = vld [vmem:[#allocation5 + $0x5c] sm:$0xf]
    %v140 = vld [vmem:[#allocation5 + $0x60] sm:$0xf]
    %v141 = vld [vmem:[#allocation5 + $0x64] sm:$0xf]
    %v142 = vld [vmem:[#allocation5 + $0x68] sm:$0xf]
    %v143 = vld [vmem:[#allocation5 + $0x6c] sm:$0xf]
    %v144 = vld [vmem:[#allocation5 + $0x70] sm:$0xf]
    %v145 = vld [vmem:[#allocation5 + $0x74] sm:$0xf]
    %v146 = vld [vmem:[#allocation5 + $0x78] sm:$0xf]
    %v147 = vld [vmem:[#allocation5 + $0x7c] sm:$0xf]
    %v148 = vld [vmem:[%s2] sm:$0x1]
    %v150 = vlaneseq
    %v151 = vshrl.u32 %v150, 7
    %v152 = vsub.s32 0, %v151
    %v153 = vrot.slane %v148, %v152
    %v187 = vunpack.c.l.b16 %v116
    %v188 = vunpack.c.l.b16 %v117
    %v189 = vunpack.c.l.b16 %v118
    %v190 = vunpack.c.l.b16 %v119
    %v191 = vunpack.c.l.b16 %v120
    %v192 = vunpack.c.l.b16 %v121
    %v193 = vunpack.c.l.b16 %v122
    %v194 = vunpack.c.l.b16 %v123
    %v195 = vunpack.c.l.b16 %v124
    %v196 = vunpack.c.l.b16 %v125
    %v197 = vunpack.c.l.b16 %v126
    %v198 = vunpack.c.l.b16 %v127
    %v199 = vunpack.c.l.b16 %v128
    %v200 = vunpack.c.l.b16 %v129
    %v201 = vunpack.c.l.b16 %v130
    %v202 = vunpack.c.l.b16 %v131
    %v203 = vunpack.c.l.b16 %v132
    %v204 = vunpack.c.l.b16 %v133
    %v205 = vunpack.c.l.b16 %v134
    %v206 = vunpack.c.l.b16 %v135
    %v207 = vunpack.c.l.b16 %v136
    %v208 = vunpack.c.l.b16 %v137
    %v209 = vunpack.c.l.b16 %v138
    %v210 = vunpack.c.l.b16 %v139
    %v211 = vunpack.c.l.b16 %v140
    %v212 = vunpack.c.l.b16 %v141
    %v213 = vunpack.c.l.b16 %v142
    %v214 = vunpack.c.l.b16 %v143
    %v215 = vunpack.c.l.b16 %v144
    %v216 = vunpack.c.l.b16 %v145
    %v217 = vunpack.c.l.b16 %v146
    %v218 = vunpack.c.l.b16 %v147
    %v219 = vpack.c.b16 %v188, %v187
    %v220 = vpack.c.b16 %v190, %v189
    %v221 = vpack.c.b16 %v192, %v191
    %v222 = vpack.c.b16 %v194, %v193
    %v223 = vpack.c.b16 %v196, %v195
    %v224 = vpack.c.b16 %v198, %v197
    %v225 = vpack.c.b16 %v200, %v199
    %v226 = vpack.c.b16 %v202, %v201
    %v227 = vpack.c.b16 %v204, %v203
    %v228 = vpack.c.b16 %v206, %v205
    %v229 = vpack.c.b16 %v208, %v207
    %v230 = vpack.c.b16 %v210, %v209
    %v231 = vpack.c.b16 %v212, %v211
    %v232 = vpack.c.b16 %v214, %v213
    %v233 = vpack.c.b16 %v216, %v215
    %v234 = vpack.c.b16 %v218, %v217
    %251 = vmatprep.subr.bf16.mxu0 0
    %252 = vmatpush1.bf16.msra.mxu0 %v226
    %253 = vmatprep.subr.bf16.mxu0 0
    %254 = vmatpush1.bf16.msra.mxu0 %v225
    %255 = vmatprep.subr.bf16.mxu0 0
    %256 = vmatpush1.bf16.msra.mxu0 %v224
    %257 = vmatprep.subr.bf16.mxu0 0
    %258 = vmatpush1.bf16.msra.mxu0 %v223
    %259 = vmatprep.subr.bf16.mxu0 0
    %260 = vmatpush1.bf16.msra.mxu0 %v222
    %261 = vmatprep.subr.bf16.mxu0 0
    %262 = vmatpush1.bf16.msra.mxu0 %v221
    %263 = vmatprep.subr.bf16.mxu0 0
    %264 = vmatpush1.bf16.msra.mxu0 %v220
    %265 = vmatprep.subr.bf16.mxu0 0
    %266 = vmatpush1.bf16.msra.mxu0 %v219
    %267 = vmatprep.subr.bf16.mxu0 0
    %268 = vmatpush2.bf16.msra.mxu0 %v234
    %269 = vmatprep.subr.bf16.mxu0 0
    %270 = vmatpush2.bf16.msra.mxu0 %v233
    %271 = vmatprep.subr.bf16.mxu0 0
    %272 = vmatpush2.bf16.msra.mxu0 %v232
    %273 = vmatprep.subr.bf16.mxu0 0
    %274 = vmatpush2.bf16.msra.mxu0 %v231
    %275 = vmatprep.subr.bf16.mxu0 0
    %276 = vmatpush2.bf16.msra.mxu0 %v230
    %277 = vmatprep.subr.bf16.mxu0 0
    %278 = vmatpush2.bf16.msra.mxu0 %v229
    %279 = vmatprep.subr.bf16.mxu0 0
    %280 = vmatpush2.bf16.msra.mxu0 %v228
    %281 = vmatprep.subr.bf16.mxu0 0
    %282 = vmatpush2.bf16.msra.mxu0 %v227
    %283 = vmatprep.mubr.bf16.mxu0 %v93
    %284 = vmatmul.mubr.bf16.gmra.mxu0 %v92
    %v285 = vpop.f32.mrf.mxu0
    %v286 = vadd.f32 %v153, %v285
    %v287 = vpop.f32.mrf.mxu0
    %v288 = vpop.f32.mrf.mxu0
    %v289 = vadd.f32 %v153, %v288
    %v290 = vpop.f32.mrf.mxu0
    %291 = vmatprep.mubr.bf16.mxu0 %v95
    %292 = vmatmul.mubr.bf16.gmra.mxu0 %v94
    %v293 = vpop.f32.mrf.mxu0
    %v294 = vadd.f32 %v153, %v293
    %v295 = vpop.f32.mrf.mxu0
    %v296 = vpop.f32.mrf.mxu0
    %v297 = vadd.f32 %v153, %v296
    %v298 = vpop.f32.mrf.mxu0
    %299 = vmatprep.mubr.bf16.mxu0 %v97
    %300 = vmatmul.mubr.bf16.gmra.mxu0 %v96
    %v301 = vpop.f32.mrf.mxu0
    %v302 = vadd.f32 %v153, %v301
    %v303 = vpop.f32.mrf.mxu0
    %v304 = vpop.f32.mrf.mxu0
    %v305 = vadd.f32 %v153, %v304
    %v306 = vpop.f32.mrf.mxu0
    %307 = vmatprep.mubr.bf16.mxu0 %v99
    %308 = vmatmul.mubr.bf16.gmra.mxu0 %v98
    %v309 = vpop.f32.mrf.mxu0
    %v310 = vadd.f32 %v153, %v309
    %v311 = vpop.f32.mrf.mxu0
    %v312 = vpop.f32.mrf.mxu0
    %v313 = vadd.f32 %v153, %v312
    %v314 = vpop.f32.mrf.mxu0
    %315 = vmatprep.mubr.bf16.mxu0 %v101
    %316 = vmatmul.mubr.bf16.gmra.mxu0 %v100
    %v317 = vpop.f32.mrf.mxu0
    %v318 = vadd.f32 %v153, %v317
    %v319 = vpop.f32.mrf.mxu0
    %v320 = vpop.f32.mrf.mxu0
    %v321 = vadd.f32 %v153, %v320
    %v322 = vpop.f32.mrf.mxu0
    %323 = vmatprep.mubr.bf16.mxu0 %v103
    %324 = vmatmul.mubr.bf16.gmra.mxu0 %v102
    %v325 = vpop.f32.mrf.mxu0
    %v326 = vadd.f32 %v153, %v325
    %v327 = vpop.f32.mrf.mxu0
    %v328 = vpop.f32.mrf.mxu0
    %v329 = vadd.f32 %v153, %v328
    %v330 = vpop.f32.mrf.mxu0
    %331 = vmatprep.mubr.bf16.mxu0 %v105
    %332 = vmatmul.mubr.bf16.gmra.mxu0 %v104
    %v333 = vpop.f32.mrf.mxu0
    %v334 = vadd.f32 %v153, %v333
    %v335 = vpop.f32.mrf.mxu0
    %v336 = vpop.f32.mrf.mxu0
    %v337 = vadd.f32 %v153, %v336
    %v338 = vpop.f32.mrf.mxu0
    %339 = vmatprep.mubr.bf16.mxu0 %v107
    %340 = vmatmul.mubr.bf16.gmra.mxu0 %v106
    %v341 = vpop.f32.mrf.mxu0
    %v342 = vadd.f32 %v153, %v341
    %v343 = vpop.f32.mrf.mxu0
    %v344 = vpop.f32.mrf.mxu0
    %v345 = vadd.f32 %v153, %v344
    %v346 = vpop.f32.mrf.mxu0
    %347 = vmatprep.mubr.bf16.mxu0 %v109
    %348 = vmatmul.mubr.bf16.gmra.mxu0 %v108
    %v349 = vpop.f32.mrf.mxu0
    %v350 = vadd.f32 %v153, %v349
    %v351 = vpop.f32.mrf.mxu0
    %v352 = vpop.f32.mrf.mxu0
    %v353 = vadd.f32 %v153, %v352
    %v354 = vpop.f32.mrf.mxu0
    %355 = vmatprep.mubr.bf16.mxu0 %v111
    %356 = vmatmul.mubr.bf16.gmra.mxu0 %v110
    %v357 = vpop.f32.mrf.mxu0
    %v358 = vadd.f32 %v153, %v357
    %v359 = vpop.f32.mrf.mxu0
    %v360 = vpop.f32.mrf.mxu0
    %v361 = vadd.f32 %v153, %v360
    %v362 = vpop.f32.mrf.mxu0
    %363 = vmatprep.mubr.bf16.mxu0 %v113
    %364 = vmatmul.mubr.bf16.gmra.mxu0 %v112
    %v365 = vpop.f32.mrf.mxu0
    %v366 = vadd.f32 %v153, %v365
    %v367 = vpop.f32.mrf.mxu0
    %v368 = vpop.f32.mrf.mxu0
    %v369 = vadd.f32 %v153, %v368
    %v370 = vpop.f32.mrf.mxu0
    %371 = vmatprep.mubr.bf16.mxu0 %v115
    %372 = vmatmul.mubr.bf16.gmra.mxu0 %v114
    %v373 = vpop.f32.mrf.mxu0
    %v374 = vadd.f32 %v153, %v373
    %v375 = vpop.f32.mrf.mxu0
    %v376 = vpop.f32.mrf.mxu0
    %v377 = vadd.f32 %v153, %v376
    %v378 = vpop.f32.mrf.mxu0
    %379 = vdwg.mxu0
    %v380 = vmax.f32 %v286, 0.0
    %v381 = vmax.f32 %v289, 0.0
    %v382 = vmax.f32 %v294, 0.0
    %v383 = vmax.f32 %v297, 0.0
    %v384 = vmax.f32 %v302, 0.0
    %v385 = vmax.f32 %v305, 0.0
    %v386 = vmax.f32 %v310, 0.0
    %v387 = vmax.f32 %v313, 0.0
    %v388 = vmax.f32 %v318, 0.0
    %v389 = vmax.f32 %v321, 0.0
    %v390 = vmax.f32 %v326, 0.0
    %v391 = vmax.f32 %v329, 0.0
    %v392 = vmax.f32 %v334, 0.0
    %v393 = vmax.f32 %v337, 0.0
    %v394 = vmax.f32 %v342, 0.0
    %v395 = vmax.f32 %v345, 0.0
    %v396 = vmax.f32 %v350, 0.0
    %v397 = vmax.f32 %v353, 0.0
    %v398 = vmax.f32 %v358, 0.0
    %v399 = vmax.f32 %v361, 0.0
    %v400 = vmax.f32 %v366, 0.0
    %v401 = vmax.f32 %v369, 0.0
    %v402 = vmax.f32 %v374, 0.0
    %v403 = vmax.f32 %v377, 0.0
    %404 = vst [vmem:[#allocation7] sm:$0xff] %v380
    %405 = vst [vmem:[#allocation7 + $0x8] sm:$0xff] %v381
    %406 = vst [vmem:[#allocation7 + $0x10] sm:$0xff] %v382
    %407 = vst [vmem:[#allocation7 + $0x18] sm:$0xff] %v383
    %408 = vst [vmem:[#allocation7 + $0x20] sm:$0xff] %v384
    %409 = vst [vmem:[#allocation7 + $0x28] sm:$0xff] %v385
    %410 = vst [vmem:[#allocation7 + $0x30] sm:$0xff] %v386
    %411 = vst [vmem:[#allocation7 + $0x38] sm:$0xff] %v387
    %412 = vst [vmem:[#allocation7 + $0x40] sm:$0xff] %v388
    %413 = vst [vmem:[#allocation7 + $0x48] sm:$0xff] %v389
    %414 = vst [vmem:[#allocation7 + $0x50] sm:$0xff] %v390
    %415 = vst [vmem:[#allocation7 + $0x58] sm:$0xff] %v391
    %416 = vst [vmem:[#allocation7 + $0x60] sm:$0xff] %v392
    %417 = vst [vmem:[#allocation7 + $0x68] sm:$0xff] %v393
    %418 = vst [vmem:[#allocation7 + $0x70] sm:$0xff] %v394
    %419 = vst [vmem:[#allocation7 + $0x78] sm:$0xff] %v395
    %420 = vst [vmem:[#allocation7 + $0x80] sm:$0xff] %v396
    %421 = vst [vmem:[#allocation7 + $0x88] sm:$0xff] %v397
    %422 = vst [vmem:[#allocation7 + $0x90] sm:$0xff] %v398
    %423 = vst [vmem:[#allocation7 + $0x98] sm:$0xff] %v399
    %424 = vst [vmem:[#allocation7 + $0xa0] sm:$0xff] %v400
    %425 = vst [vmem:[#allocation7 + $0xa8] sm:$0xff] %v401
    %426 = vst [vmem:[#allocation7 + $0xb0] sm:$0xff] %v402
    %427 = vst [vmem:[#allocation7 + $0xb8] sm:$0xff] %v403
    // Predicated region
    $region22: #{tpu_custom_call.1} parent=1 // pred_check
      _
    $region23: #{tpu_custom_call.1} parent=1 // pred_check_branch
      %429 = sbr.rel (0) target = $region25
    $region24: #{tpu_custom_call.1} parent=1 // pred_region
      %s431 = ssub.s32 3072, 3072
      %432 = vsyncadd [#allocation4], %s431
      %s433 = sshll.u32 [#allocation7], 4
      %s434 = int_to_ptr.vmem [resolvable:$true] %s433
      %439 = dma.vmem_to_hbm [thread:$0]  %s434, 3072, %s3, [#allocation4], 128, 128, 8
    $region25: #{tpu_custom_call.1} parent=1 // pred_fallthru
      _
    // Predicated region
    $region26: #{tpu_custom_call.1} parent=1 // pred_check
      _
    $region27: #{tpu_custom_call.1} parent=1 // pred_check_branch
      %441 = sbr.rel (0) target = $region29
    $region28: #{tpu_custom_call.1} parent=1 // pred_region
      %442 = dma.done [#allocation4], 3072
    $region29: #{tpu_custom_call.1} parent=1 // pred_fallthru
      _
    %443 = vsyncpa [#allocation3], 1
    %444 = vsyncpa [#allocation6], 1
    %445 = vsyncpa [#allocation4], 1

</llo_original>
